<compile_context>
chip_gen: v5e
topology: v5e:2x2
jax: 0.10.0
libtpu: 0.0.40
codegen_flags: <defaults>
</compile_context>

<pallas_src>
import numpy as np
import jax
import jax.numpy as jnp
from jax import lax
from jax.experimental import pallas as pl
from jax.experimental.pallas import tpu as pltpu


# -----------------------------------------------------------------------------
# Pallas kernel: bt images per grid step, fori_loop over images, 4 matmuls each.
# -----------------------------------------------------------------------------
def dc_kernel(x_ref, ks_ref, maskv_ref, fwc_ref, bh_ref, bhc_ref, bwc_ref, o_ref):
    # x_ref   : (bt, 1, H, W) f32   predicted image (channel 0 selected by BlockSpec)
    # ks_ref  : (bt, 2H, W)  f32    measured k-space, vertical [Re; Im]
    # maskv   : (2H, W)      f32    undersampling mask, tiled vertically
    # fwc     : (W, 2W)   cdt       [FWr | FWi]                (fwd column DFT)
    # bh      : (2H, 2H)  cdt       [[FHr, -FHi], [FHi, FHr]]  (fwd row DFT)
    # bhc     : (2H, 2H)  cdt       [[FHr,  FHi], [-FHi, FHr]] (inv row DFT)
    # bwc     : (2W, 2W)  cdt       [[FWr, -FWi], [FWi, FWr]]  (inv column DFT)
    # o_ref   : (bt, 1, H, W) f32   |ifft| output
    H = x_ref.shape[2]
    W = x_ref.shape[3]
    bt = x_ref.shape[0]
    cdt = fwc_ref.dtype

    def body(b, carry):
        mv = maskv_ref[...]
        one_mv = 1.0 - mv

        x = x_ref[b, 0].astype(cdt)                                   # (H, W)

        # forward column DFT of the real image: A = X @ [FWr | FWi]  -> [Ar | Ai]
        ah = jnp.dot(x, fwc_ref[...], preferred_element_type=jnp.float32)   # (H, 2W)

        # horizontal -> vertical complex layout: Av = [Ar; Ai]
        av = jnp.concatenate([ah[:, :W], ah[:, W:]], axis=0).astype(cdt)    # (2H, W)

        # forward row DFT: Kv = [[FHr,-FHi],[FHi,FHr]] @ Av = [Kr; Ki]
        kv = jnp.dot(bh_ref[...], av, preferred_element_type=jnp.float32)   # (2H, W)

        # data consistency in k-space (f32): mask*measured + (1-mask)*predicted
        uv = (mv * ks_ref[b] + one_mv * kv).astype(cdt)                     # (2H, W)

        # inverse row DFT: Vv = [[FHr,FHi],[-FHi,FHr]] @ Uv = [Vr; Vi]
        vv = jnp.dot(bhc_ref[...], uv, preferred_element_type=jnp.float32)  # (2H, W)

        # vertical -> horizontal complex layout: Vh = [Vr | Vi]
        vh = jnp.concatenate([vv[:H, :], vv[H:, :]], axis=1).astype(cdt)    # (H, 2W)

        # inverse column DFT: Img = Vh @ [[FWr,-FWi],[FWi,FWr]] = [Ir | Ii]
        img = jnp.dot(vh, bwc_ref[...], preferred_element_type=jnp.float32)  # (H, 2W)

        ir = img[:, :W]
        ii = img[:, W:]
        o_ref[b, 0] = jnp.sqrt(ir * ir + ii * ii)
        return carry

    lax.fori_loop(0, bt, body, 0)


# -----------------------------------------------------------------------------
# DFT constants (ortho normalization: 1/sqrt(N) each direction), block matrices
# so every complex matmul is a single real matmul with no quadrant recombination.
# -----------------------------------------------------------------------------
def _dft_constants(H, W, dtype):
    def real_imag(n):
        k = np.arange(n)
        ang = -2.0 * np.pi * np.outer(k, k) / n
        s = 1.0 / np.sqrt(n)
        return np.cos(ang) * s, np.sin(ang) * s

    fhr, fhi = real_imag(H)
    fwr, fwi = real_imag(W)
    fwc = np.concatenate([fwr, fwi], axis=1)            # (W, 2W)   forward cols
    bh = np.block([[fhr, -fhi], [fhi, fhr]])            # (2H, 2H)  forward rows
    bhc = np.block([[fhr, fhi], [-fhi, fhr]])           # (2H, 2H)  inverse rows (conj)
    bwc = np.block([[fwr, -fwi], [fwi, fwr]])           # (2W, 2W)  inverse cols (conj)
    return tuple(jnp.asarray(np.asarray(a, np.float32), dtype=dtype)
                 for a in (fwc, bh, bhc, bwc))


# -----------------------------------------------------------------------------
# Generation-aware VMEM / batch-tile sizing
# -----------------------------------------------------------------------------
def _vmem_capacity_bytes():
    try:
        info = pltpu.get_tpu_info()
        return int(getattr(info, "vmem_capacity_bytes", 64 * 1024 * 1024))
    except Exception:
        return 64 * 1024 * 1024      # conservative: v7x per-TensorCore VMEM


def _pick_batch_tile(B, H, W, vmem_cap):
    # Double-buffered per-image I/O: image + 2 k-space planes + output, f32.
    per_img_io = 2 * 4 * H * W * 4
    budget = int(0.45 * vmem_cap)    # leave room for constants, intermediates, internals
    best_key, best_bt = None, 1
    for bt in range(1, B + 1):
        if B % bt:
            continue
        if bt > 1 and bt * per_img_io > budget:
            continue
        g = B // bt
        # prefer: even grid (v7x dual-TensorCore), then grid >= 2, then larger bt.
        key = (g % 2 == 0, g >= 2, bt)
        if best_key is None or key > best_key:
            best_key, best_bt = key, bt
    return best_bt


def _vmem_limit_bytes(bt, H, W, compute_dtype, vmem_cap):
    it = jnp.dtype(compute_dtype).itemsize
    io_blocks = 2 * 4 * bt * H * W * 4                       # double-buffered f32 I/O blocks
    const_blocks = 2 * (2 * H * W * 4 + (8 * H * H + 6 * W * W) * it)
    per_image_live = 80 * H * W                              # one image's matmul intermediates
    needed = io_blocks + const_blocks + per_image_live + (8 << 20)
    return int(min(0.75 * vmem_cap, max(32 << 20, needed)))


# -----------------------------------------------------------------------------
# Wrapper
# -----------------------------------------------------------------------------
def data_consistency_layer(predicted_img, us_kspace, us_mask, *,
                           compute_dtype=jnp.bfloat16):
    """predicted_img: (B, C, H, W) float
       us_kspace    : (B, 1, H, W, 2) float, (real, imag) on the last axis
       us_mask      : single shared mask with H*W elements (e.g. (1,1,H,W,1))
       compute_dtype: dtype of the MXU matmul operands (accumulation always f32)
       returns      : (B, 1, H, W) float32  (matches the torch module output)"""
    B, C, H, W = predicted_img.shape
    cdt = jnp.dtype(compute_dtype)

    mask = jnp.asarray(us_mask, jnp.float32).reshape(H, W)
    mask_v = jnp.concatenate([mask, mask], axis=0)                    # (2H, W)

    # Measured k-space packed once, directly in the kernel's working layout
    # (per-image vertical [Re; Im]).  Single fused slice+concat pass.
    # TODO(synk): fuse this pack into the producer to avoid the extra HBM pass on v5e.
    ks_v = jnp.concatenate(
        [us_kspace[:, 0, :, :, 0], us_kspace[:, 0, :, :, 1]], axis=1
    ).astype(jnp.float32)                                             # (B, 2H, W)

    fwc, bh, bhc, bwc = _dft_constants(H, W, cdt)

    cap = _vmem_capacity_bytes()
    bt = _pick_batch_tile(B, H, W, cap)
    grid = (B // bt,)
    vmem_limit = _vmem_limit_bytes(bt, H, W, cdt, cap)

    out = pl.pallas_call(
        dc_kernel,
        out_shape=jax.ShapeDtypeStruct((B, 1, H, W), jnp.float32),
        grid_spec=pltpu.PrefetchScalarGridSpec(
            num_scalar_prefetch=0,
            grid=grid,
            in_specs=[
                pl.BlockSpec((bt, 1, H, W), lambda i: (i, 0, 0, 0)),   # image (channel 0)
                pl.BlockSpec((bt, 2 * H, W), lambda i: (i, 0, 0)),     # k-space [Re; Im]
                pl.BlockSpec((2 * H, W), lambda i: (0, 0)),            # mask (grid-invariant)
                pl.BlockSpec((W, 2 * W), lambda i: (0, 0)),            # [FWr | FWi]
                pl.BlockSpec((2 * H, 2 * H), lambda i: (0, 0)),        # BH
                pl.BlockSpec((2 * H, 2 * H), lambda i: (0, 0)),        # BHc
                pl.BlockSpec((2 * W, 2 * W), lambda i: (0, 0)),        # BWc
            ],
            out_specs=pl.BlockSpec((bt, 1, H, W), lambda i: (i, 0, 0, 0)),
        ),
        compiler_params=pltpu.CompilerParams(
            dimension_semantics=("parallel",),
            vmem_limit_bytes=vmem_limit),
    )(predicted_img.astype(jnp.float32), ks_v, mask_v, fwc, bh, bhc, bwc)
    return out


# -----------------------------------------------------------------------------
# Pure-JAX reference (mirrors the torch forward, ortho-normalized FFTs)
# -----------------------------------------------------------------------------
def data_consistency_ref(predicted_img, us_kspace, us_mask):
    B, C, H, W = predicted_img.shape
    x = predicted_img[:, 0].astype(jnp.float32)
    kpred = jnp.fft.fft2(x, norm="ortho")
    ks = us_kspace[:, 0, :, :, 0] + 1j * us_kspace[:, 0, :, :, 1]
    m = us_mask.reshape(H, W)
    upd = m * ks + (1.0 - m) * kpred
    img = jnp.fft.ifft2(upd, norm="ortho")
    return jnp.abs(img)[:, None].astype(jnp.float32)


if __name__ == "__main__":
    B, C, H, W = 2, 4, 16, 16
    key = jax.random.PRNGKey(0)
    k1, k2, k3 = jax.random.split(key, 3)

    predicted_img = jax.random.normal(k1, (B, C, H, W), dtype=jnp.float32)
    us_kspace = jax.random.normal(k2, (B, 1, H, W, 2), dtype=jnp.float32)
    us_mask = (jax.random.uniform(k3, (1, 1, H, W, 1)) < 0.33).astype(jnp.float32)

    ref = data_consistency_ref(predicted_img, us_kspace, us_mask)

    # exactness of the block-DFT pipeline (f32 MXU path)
    out_f32 = jax.block_until_ready(
        data_consistency_layer(predicted_img, us_kspace, us_mask,
                               compute_dtype=jnp.float32))
    assert out_f32.shape == (B, 1, H, W) and out_f32.dtype == jnp.float32
    err_f32 = float(jnp.max(jnp.abs(out_f32 - ref)))
    assert err_f32 < 1e-3, f"f32 max abs err {err_f32}"

    # default fast path: bf16 MXU operands, f32 accumulation
    out_bf16 = jax.block_until_ready(
        data_consistency_layer(predicted_img, us_kspace, us_mask))
    assert out_bf16.shape == (B, 1, H, W) and out_bf16.dtype == jnp.float32
    err_bf16 = float(jnp.max(jnp.abs(out_bf16 - ref)))
    assert err_bf16 < 0.12, f"bf16 max abs err {err_bf16}"

    print("KERNEL_OK")
</pallas_src>

<mosaic_0001>
module attributes {stable_mosaic.version = 11 : i64} {
  func.func @dc_kernel(%arg0: i32, %arg1: memref<1x1x16x16xf32, #tpu.memory_space<vmem>>, %arg2: memref<1x32x16xf32, #tpu.memory_space<vmem>>, %arg3: memref<32x16xf32, #tpu.memory_space<vmem>>, %arg4: memref<16x32xf32, #tpu.memory_space<vmem>>, %arg5: memref<32x32xf32, #tpu.memory_space<vmem>>, %arg6: memref<32x32xf32, #tpu.memory_space<vmem>>, %arg7: memref<32x32xf32, #tpu.memory_space<vmem>>, %arg8: memref<1x1x16x16xf32, #tpu.memory_space<vmem>>) attributes {dimension_semantics = [#tpu.dimension_semantics<parallel>], iteration_bounds = array<i64: 2>, scalar_prefetch = 0 : i64, scratch_operands = 0 : i64, tpu.core_type = #tpu.core_type<tc>, window_params = [{transform_indices = @transform_0, window_bounds = array<i64: 1, 1, 16, 16>}, {transform_indices = @transform_1, window_bounds = array<i64: 1, 32, 16>}, {pipeline_mode = #tpu.pipeline_mode<synchronous>, transform_indices = @transform_2, window_bounds = array<i64: 32, 16>}, {pipeline_mode = #tpu.pipeline_mode<synchronous>, transform_indices = @transform_3, window_bounds = array<i64: 16, 32>}, {pipeline_mode = #tpu.pipeline_mode<synchronous>, transform_indices = @transform_4, window_bounds = array<i64: 32, 32>}, {pipeline_mode = #tpu.pipeline_mode<synchronous>, transform_indices = @transform_5, window_bounds = array<i64: 32, 32>}, {pipeline_mode = #tpu.pipeline_mode<synchronous>, transform_indices = @transform_6, window_bounds = array<i64: 32, 32>}, {transform_indices = @transform_7, window_bounds = array<i64: 1, 1, 16, 16>}]} {
    %c0_i32 = arith.constant 0 : i32
    %c0 = arith.constant 0 : index
    %c0_0 = arith.constant 0 : index
    %0 = vector.load %arg3[%c0, %c0_0] : memref<32x16xf32, #tpu.memory_space<vmem>>, vector<32x16xf32>
    %cst = arith.constant 1.000000e+00 : f32
    %1 = vector.broadcast %cst : f32 to vector<32x16xf32>
    %2 = arith.subf %1, %0 : vector<32x16xf32>
    %3 = arith.index_cast %c0_i32 : i32 to index
    %c0_1 = arith.constant 0 : index
    %c0_2 = arith.constant 0 : index
    %c0_3 = arith.constant 0 : index
    %4 = vector.load %arg1[%3, %c0_1, %c0_2, %c0_3] : memref<1x1x16x16xf32, #tpu.memory_space<vmem>>, vector<1x1x16x16xf32>
    %5 = vector.shape_cast %4 : vector<1x1x16x16xf32> to vector<16x16xf32>
    %c0_4 = arith.constant 0 : index
    %c0_5 = arith.constant 0 : index
    %6 = vector.load %arg4[%c0_4, %c0_5] : memref<16x32xf32, #tpu.memory_space<vmem>>, vector<16x32xf32>
    %cst_6 = arith.constant dense<0.000000e+00> : vector<16x32xf32>
    %7 = tpu.matmul %5, %6, %cst_6 {dimension_numbers = #tpu.dot_dimension_numbers<[1], [0], [0], [1], [0, 0, 1, 1], [], []>} : vector<16x16xf32>, vector<16x32xf32>, vector<16x32xf32> -> vector<16x32xf32>
    %8 = vector.extract_strided_slice %7 {offsets = [0, 0], sizes = [16, 16], strides = [1, 1]} : vector<16x32xf32> to vector<16x16xf32>
    %9 = vector.extract_strided_slice %7 {offsets = [0, 16], sizes = [16, 16], strides = [1, 1]} : vector<16x32xf32> to vector<16x16xf32>
    %10 = tpu.concatenate %8, %9 in 0 : vector<16x16xf32>, vector<16x16xf32> -> vector<32x16xf32>
    %c0_7 = arith.constant 0 : index
    %c0_8 = arith.constant 0 : index
    %11 = vector.load %arg5[%c0_7, %c0_8] : memref<32x32xf32, #tpu.memory_space<vmem>>, vector<32x32xf32>
    %cst_9 = arith.constant dense<0.000000e+00> : vector<32x16xf32>
    %12 = tpu.matmul %11, %10, %cst_9 {dimension_numbers = #tpu.dot_dimension_numbers<[1], [0], [0], [1], [0, 0, 1, 1], [], []>} : vector<32x32xf32>, vector<32x16xf32>, vector<32x16xf32> -> vector<32x16xf32>
    %13 = arith.index_cast %c0_i32 : i32 to index
    %c0_10 = arith.constant 0 : index
    %c0_11 = arith.constant 0 : index
    %14 = vector.load %arg2[%13, %c0_10, %c0_11] : memref<1x32x16xf32, #tpu.memory_space<vmem>>, vector<1x32x16xf32>
    %15 = vector.shape_cast %14 : vector<1x32x16xf32> to vector<32x16xf32>
    %16 = arith.mulf %0, %15 : vector<32x16xf32>
    %17 = arith.mulf %2, %12 : vector<32x16xf32>
    %18 = arith.addf %16, %17 : vector<32x16xf32>
    %c0_12 = arith.constant 0 : index
    %c0_13 = arith.constant 0 : index
    %19 = vector.load %arg6[%c0_12, %c0_13] : memref<32x32xf32, #tpu.memory_space<vmem>>, vector<32x32xf32>
    %cst_14 = arith.constant dense<0.000000e+00> : vector<32x16xf32>
    %20 = tpu.matmul %19, %18, %cst_14 {dimension_numbers = #tpu.dot_dimension_numbers<[1], [0], [0], [1], [0, 0, 1, 1], [], []>} : vector<32x32xf32>, vector<32x16xf32>, vector<32x16xf32> -> vector<32x16xf32>
    %21 = vector.extract_strided_slice %20 {offsets = [0, 0], sizes = [16, 16], strides = [1, 1]} : vector<32x16xf32> to vector<16x16xf32>
    %22 = vector.extract_strided_slice %20 {offsets = [16, 0], sizes = [16, 16], strides = [1, 1]} : vector<32x16xf32> to vector<16x16xf32>
    %23 = tpu.concatenate %21, %22 in 1 : vector<16x16xf32>, vector<16x16xf32> -> vector<16x32xf32>
    %c0_15 = arith.constant 0 : index
    %c0_16 = arith.constant 0 : index
    %24 = vector.load %arg7[%c0_15, %c0_16] : memref<32x32xf32, #tpu.memory_space<vmem>>, vector<32x32xf32>
    %cst_17 = arith.constant dense<0.000000e+00> : vector<16x32xf32>
    %25 = tpu.matmul %23, %24, %cst_17 {dimension_numbers = #tpu.dot_dimension_numbers<[1], [0], [0], [1], [0, 0, 1, 1], [], []>} : vector<16x32xf32>, vector<32x32xf32>, vector<16x32xf32> -> vector<16x32xf32>
    %26 = vector.extract_strided_slice %25 {offsets = [0, 0], sizes = [16, 16], strides = [1, 1]} : vector<16x32xf32> to vector<16x16xf32>
    %27 = vector.extract_strided_slice %25 {offsets = [0, 16], sizes = [16, 16], strides = [1, 1]} : vector<16x32xf32> to vector<16x16xf32>
    %28 = arith.mulf %26, %26 : vector<16x16xf32>
    %29 = arith.mulf %27, %27 : vector<16x16xf32>
    %30 = arith.addf %28, %29 : vector<16x16xf32>
    %31 = math.sqrt %30 : vector<16x16xf32>
    %32 = arith.index_cast %c0_i32 : i32 to index
    %c0_18 = arith.constant 0 : index
    %c0_19 = arith.constant 0 : index
    %c0_20 = arith.constant 0 : index
    %33 = vector.load %arg8[%32, %c0_18, %c0_19, %c0_20] : memref<1x1x16x16xf32, #tpu.memory_space<vmem>>, vector<1x1x16x16xf32>
    %34 = vector.shape_cast %33 : vector<1x1x16x16xf32> to vector<16x16xf32>
    %35 = vector.shape_cast %31 : vector<16x16xf32> to vector<1x1x16x16xf32>
    tpu.vector_store %arg8[%32, %c0_18, %c0_19, %c0_20], %35 {strides = array<i32>} : memref<1x1x16x16xf32, #tpu.memory_space<vmem>>, vector<1x1x16x16xf32>,
    %c1_i32 = arith.constant 1 : i32
    return
  }
  func.func @transform_0(%arg0: i32) -> (i32, i32, i32, i32) {
    %c0_i32 = arith.constant 0 : i32
    %c0_i32_0 = arith.constant 0 : i32
    %c0_i32_1 = arith.constant 0 : i32
    %c0_i32_2 = arith.constant 0 : i32
    return %arg0, %c0_i32, %c0_i32_0, %c0_i32_1 : i32, i32, i32, i32
  }
  func.func @transform_1(%arg0: i32) -> (i32, i32, i32) {
    %c0_i32 = arith.constant 0 : i32
    %c0_i32_0 = arith.constant 0 : i32
    %c0_i32_1 = arith.constant 0 : i32
    return %arg0, %c0_i32, %c0_i32_0 : i32, i32, i32
  }
  func.func @transform_2(%arg0: i32) -> (i32, i32) {
    %c0_i32 = arith.constant 0 : i32
    %c0_i32_0 = arith.constant 0 : i32
    %c0_i32_1 = arith.constant 0 : i32
    return %c0_i32, %c0_i32_0 : i32, i32
  }
  func.func @transform_3(%arg0: i32) -> (i32, i32) {
    %c0_i32 = arith.constant 0 : i32
    %c0_i32_0 = arith.constant 0 : i32
    %c0_i32_1 = arith.constant 0 : i32
    return %c0_i32, %c0_i32_0 : i32, i32
  }
  func.func @transform_4(%arg0: i32) -> (i32, i32) {
    %c0_i32 = arith.constant 0 : i32
    %c0_i32_0 = arith.constant 0 : i32
    %c0_i32_1 = arith.constant 0 : i32
    return %c0_i32, %c0_i32_0 : i32, i32
  }
  func.func @transform_5(%arg0: i32) -> (i32, i32) {
    %c0_i32 = arith.constant 0 : i32
    %c0_i32_0 = arith.constant 0 : i32
    %c0_i32_1 = arith.constant 0 : i32
    return %c0_i32, %c0_i32_0 : i32, i32
  }
  func.func @transform_6(%arg0: i32) -> (i32, i32) {
    %c0_i32 = arith.constant 0 : i32
    %c0_i32_0 = arith.constant 0 : i32
    %c0_i32_1 = arith.constant 0 : i32
    return %c0_i32, %c0_i32_0 : i32, i32
  }
  func.func @transform_7(%arg0: i32) -> (i32, i32, i32, i32) {
    %c0_i32 = arith.constant 0 : i32
    %c0_i32_0 = arith.constant 0 : i32
    %c0_i32_1 = arith.constant 0 : i32
    %c0_i32_2 = arith.constant 0 : i32
    return %arg0, %c0_i32, %c0_i32_0, %c0_i32_1 : i32, i32, i32, i32
  }
}

</mosaic_0001>

<llo_original>
// kernel: tpu_custom_call.1
$region0: #{tpu_custom_call.1}
  #allocation0 [shape = 'u32[]', space=smem, size = 0x4, offset = 0x4, fixed_abs, tag = 'smem constant byte address 0x4 - core index']
  #allocation1 [shape = 'u32[72,128]{1,0:T(1,128)}', space=vmem, size = 0x9000, scoped, tag = 'internal scratch']
  %s0 = inlined_call_operand.hbm [shape: f32[2,4,16,16], index: 0, kind: input, shape index: {}]
  %s1 = inlined_call_operand.vmem [shape: f32[2,32,16], index: 1, kind: input, shape index: {}]
  %s2 = inlined_call_operand.vmem [shape: f32[32,16], index: 2, kind: input, shape index: {}]
  %s3 = inlined_call_operand.vmem [shape: f32[16,32], index: 3, kind: input, shape index: {}]
  %s4 = inlined_call_operand.vmem [shape: f32[32,32], index: 4, kind: input, shape index: {}]
  %s5 = inlined_call_operand.vmem [shape: f32[32,32], index: 5, kind: input, shape index: {}]
  %s6 = inlined_call_operand.vmem [shape: f32[32,32], index: 6, kind: input, shape index: {}]
  %s7 = inlined_call_operand.hbm [shape: f32[2,1,16,16], index: 7, kind: output, shape index: {}]
  %s8 = sld [smem:[#allocation0]]
  $region65: #{tpu_custom_call.1} parent=0
    _
  %s10 = ssub.s32 1, %s8
  %s11 = scalar_select 0, %s10, %s8
  $region1: #{tpu_custom_call.1} parent=0
    #allocation2 [shape = 'u8[16384]{0}', space=vmem, size = 0x4000, scoped, tag = 'input window, operand 0']
    #allocation3 [shape = 's32[2]{0}', space=sflag, size = 0x8, scoped, tag = 'scoped memory for tpu_custom_call.1']
    #allocation4 [shape = 's32[2]{0}', space=sflag, size = 0x8, scoped, tag = 'scoped memory for tpu_custom_call.1']
    #allocation5 [shape = 'u8[16384]{0}', space=vmem, size = 0x4000, scoped, tag = 'output window, operand 0']
    %12 = vsyncpa [#allocation3], 0
    %s13 = scalar_lea.sflag [#allocation3], 1
    %14 = vsyncpa %s13, 0
    %15 = vsyncpa [#allocation4], 0
    %s16 = scalar_lea.sflag [#allocation4], 1
    %17 = vsyncpa %s16, 0
    loop: start=0, step=1, limit=4
    $region2: #{tpu_custom_call.1} parent=1 // loop_pre_header
      _
    $region3: #{tpu_custom_call.1} parent=1 // loop_header
      %s19 = sphi 0, %s23
      %p20 = scmp.ge.s32.totalorder %s19, 4
      %s29 = sphi 0, %s31
      %s32 = sphi 0, %s29
      %s33 = sphi 0, %s32
      %s49 = sphi 0, %s33
      %s55 = sphi 0, %s57
      %s58 = sphi 0, %s55
      %s59 = sphi 0, %s58
      %s75 = sphi 0, %s59
      %s79 = sphi 0, %s79
      %s81 = sphi 0, %s79
      %s82 = sphi 0, %s81
      %s96 = sphi 0, %s82
      %s100 = sphi 0, %s100
      %s102 = sphi 0, %s100
      %s103 = sphi 0, %s102
      %s117 = sphi 0, %s103
      %s121 = sphi 0, %s121
      %s123 = sphi 0, %s121
      %s124 = sphi 0, %s123
      %s138 = sphi 0, %s124
      %s142 = sphi 0, %s142
      %s144 = sphi 0, %s142
      %s145 = sphi 0, %s144
      %s159 = sphi 0, %s145
      %s163 = sphi 0, %s163
      %s165 = sphi 0, %s163
      %s166 = sphi 0, %s165
      %s180 = sphi 0, %s166
      %s186 = sphi 0, %s188
      %s189 = sphi 0, %s186
      %s190 = sphi 0, %s189
      %s206 = sphi 0, %s190
    $region4: #{tpu_custom_call.1} parent=1 // loop_header_branch
      %22 = sbr.rel (%p20) target = $region8
    $region5: #{tpu_custom_call.1} parent=1 // loop_body
      %s24 = ssub.s32 %s19, 1
      %s25 = ssub.s32 %s19, 2
      %s26 = sadd.s32 %s19, 1
      %s27 = ssub.s32 %s19, %s26
      %p28 = scmp.eq.s32.totalorder %s27, 0
      %s30 = sadd.s32 %s29, 1
      %s31 = scalar_select %p28, %s29, %s30
      %p34 = pneg %p28
      %p35 = scmp.eq.s32.totalorder %s19, 1
      %p36 = por %p34, %p35
      %p37 = scmp.ne.s32.totalorder %s29, %s32
      %p38 = scmp.eq.s32.totalorder %s19, 0
      %p39 = por %p37, %p38
      %p40 = scmp.ne.s32.totalorder %s29, %s32
      %p41 = scmp.eq.s32.totalorder %s24, 1
      %p42 = por %p40, %p41
      %p43 = scmp.ne.s32.totalorder %s32, %s33
      %p44 = scmp.eq.s32.totalorder %s24, 0
      %p45 = por %p43, %p44
      %p46 = scmp.ne.s32.totalorder %s32, %s33
      %p47 = scmp.eq.s32.totalorder %s25, 1
      %p48 = por %p46, %p47
      %p50 = scmp.ne.s32.totalorder %s33, %s49
      %p51 = scmp.eq.s32.totalorder %s25, 0
      %p52 = por %p50, %p51
      %s53 = ssub.s32 %s19, %s26
      %p54 = scmp.eq.s32.totalorder %s53, 0
      %s56 = sadd.s32 %s55, 1
      %s57 = scalar_select %p54, %s55, %s56
      %p60 = pneg %p54
      %p61 = scmp.eq.s32.totalorder %s19, 1
      %p62 = por %p60, %p61
      %p63 = scmp.ne.s32.totalorder %s55, %s58
      %p64 = scmp.eq.s32.totalorder %s19, 0
      %p65 = por %p63, %p64
      %p66 = scmp.ne.s32.totalorder %s55, %s58
      %p67 = scmp.eq.s32.totalorder %s24, 1
      %p68 = por %p66, %p67
      %p69 = scmp.ne.s32.totalorder %s58, %s59
      %p70 = scmp.eq.s32.totalorder %s24, 0
      %p71 = por %p69, %p70
      %p72 = scmp.ne.s32.totalorder %s58, %s59
      %p73 = scmp.eq.s32.totalorder %s25, 1
      %p74 = por %p72, %p73
      %p76 = scmp.ne.s32.totalorder %s59, %s75
      %p77 = scmp.eq.s32.totalorder %s25, 0
      %p78 = por %p76, %p77
      %s80 = sadd.s32 %s79, 1
      %p83 = scmp.eq.s32.totalorder %s19, 1
      %p84 = scmp.ne.s32.totalorder %s79, %s81
      %p85 = scmp.eq.s32.totalorder %s19, 0
      %p86 = por %p84, %p85
      %p87 = scmp.ne.s32.totalorder %s79, %s81
      %p88 = scmp.eq.s32.totalorder %s24, 1
      %p89 = por %p87, %p88
      %p90 = scmp.ne.s32.totalorder %s81, %s82
      %p91 = scmp.eq.s32.totalorder %s24, 0
      %p92 = por %p90, %p91
      %p93 = scmp.ne.s32.totalorder %s81, %s82
      %p94 = scmp.eq.s32.totalorder %s25, 1
      %p95 = por %p93, %p94
      %p97 = scmp.ne.s32.totalorder %s82, %s96
      %p98 = scmp.eq.s32.totalorder %s25, 0
      %p99 = por %p97, %p98
      %s101 = sadd.s32 %s100, 1
      %p104 = scmp.eq.s32.totalorder %s19, 1
      %p105 = scmp.ne.s32.totalorder %s100, %s102
      %p106 = scmp.eq.s32.totalorder %s19, 0
      %p107 = por %p105, %p106
      %p108 = scmp.ne.s32.totalorder %s100, %s102
      %p109 = scmp.eq.s32.totalorder %s24, 1
      %p110 = por %p108, %p109
      %p111 = scmp.ne.s32.totalorder %s102, %s103
      %p112 = scmp.eq.s32.totalorder %s24, 0
      %p113 = por %p111, %p112
      %p114 = scmp.ne.s32.totalorder %s102, %s103
      %p115 = scmp.eq.s32.totalorder %s25, 1
      %p116 = por %p114, %p115
      %p118 = scmp.ne.s32.totalorder %s103, %s117
      %p119 = scmp.eq.s32.totalorder %s25, 0
      %p120 = por %p118, %p119
      %s122 = sadd.s32 %s121, 1
      %p125 = scmp.eq.s32.totalorder %s19, 1
      %p126 = scmp.ne.s32.totalorder %s121, %s123
      %p127 = scmp.eq.s32.totalorder %s19, 0
      %p128 = por %p126, %p127
      %p129 = scmp.ne.s32.totalorder %s121, %s123
      %p130 = scmp.eq.s32.totalorder %s24, 1
      %p131 = por %p129, %p130
      %p132 = scmp.ne.s32.totalorder %s123, %s124
      %p133 = scmp.eq.s32.totalorder %s24, 0
      %p134 = por %p132, %p133
      %p135 = scmp.ne.s32.totalorder %s123, %s124
      %p136 = scmp.eq.s32.totalorder %s25, 1
      %p137 = por %p135, %p136
      %p139 = scmp.ne.s32.totalorder %s124, %s138
      %p140 = scmp.eq.s32.totalorder %s25, 0
      %p141 = por %p139, %p140
      %s143 = sadd.s32 %s142, 1
      %p146 = scmp.eq.s32.totalorder %s19, 1
      %p147 = scmp.ne.s32.totalorder %s142, %s144
      %p148 = scmp.eq.s32.totalorder %s19, 0
      %p149 = por %p147, %p148
      %p150 = scmp.ne.s32.totalorder %s142, %s144
      %p151 = scmp.eq.s32.totalorder %s24, 1
      %p152 = por %p150, %p151
      %p153 = scmp.ne.s32.totalorder %s144, %s145
      %p154 = scmp.eq.s32.totalorder %s24, 0
      %p155 = por %p153, %p154
      %p156 = scmp.ne.s32.totalorder %s144, %s145
      %p157 = scmp.eq.s32.totalorder %s25, 1
      %p158 = por %p156, %p157
      %p160 = scmp.ne.s32.totalorder %s145, %s159
      %p161 = scmp.eq.s32.totalorder %s25, 0
      %p162 = por %p160, %p161
      %s164 = sadd.s32 %s163, 1
      %p167 = scmp.eq.s32.totalorder %s19, 1
      %p168 = scmp.ne.s32.totalorder %s163, %s165
      %p169 = scmp.eq.s32.totalorder %s19, 0
      %p170 = por %p168, %p169
      %p171 = scmp.ne.s32.totalorder %s163, %s165
      %p172 = scmp.eq.s32.totalorder %s24, 1
      %p173 = por %p171, %p172
      %p174 = scmp.ne.s32.totalorder %s165, %s166
      %p175 = scmp.eq.s32.totalorder %s24, 0
      %p176 = por %p174, %p175
      %p177 = scmp.ne.s32.totalorder %s165, %s166
      %p178 = scmp.eq.s32.totalorder %s25, 1
      %p179 = por %p177, %p178
      %p181 = scmp.ne.s32.totalorder %s166, %s180
      %p182 = scmp.eq.s32.totalorder %s25, 0
      %p183 = por %p181, %p182
      %s184 = ssub.s32 %s19, %s26
      %p185 = scmp.eq.s32.totalorder %s184, 0
      %s187 = sadd.s32 %s186, 1
      %s188 = scalar_select %p185, %s186, %s187
      %p191 = pneg %p185
      %p192 = scmp.eq.s32.totalorder %s19, 1
      %p193 = por %p191, %p192
      %p194 = scmp.ne.s32.totalorder %s186, %s189
      %p195 = scmp.eq.s32.totalorder %s19, 0
      %p196 = por %p194, %p195
      %p197 = scmp.ne.s32.totalorder %s186, %s189
      %p198 = scmp.eq.s32.totalorder %s24, 1
      %p199 = por %p197, %p198
      %p200 = scmp.ne.s32.totalorder %s189, %s190
      %p201 = scmp.eq.s32.totalorder %s24, 0
      %p202 = por %p200, %p201
      %p203 = scmp.ne.s32.totalorder %s189, %s190
      %p204 = scmp.eq.s32.totalorder %s25, 1
      %p205 = por %p203, %p204
      %p207 = scmp.ne.s32.totalorder %s190, %s206
      %p208 = scmp.eq.s32.totalorder %s25, 0
      %p209 = por %p207, %p208
      %p210 = scmp.le.s32.totalorder 1, %s19
      %p211 = scmp.lt.s32.totalorder %s19, 3
      %p212 = pnand %p210, %p211
      %p213 = pneg %p212
      // Predicated region
      $region9: #{tpu_custom_call.1} parent=5 // pred_check
        _
      $region10: #{tpu_custom_call.1} parent=5 // pred_check_branch
        %215 = sbr.rel (%p212) target = $region12
      $region11: #{tpu_custom_call.1} parent=5 // pred_region
        %s216 = ssub.s32 %s19, 1
        // Predicated region
        $region13: #{tpu_custom_call.1} parent=11 // pred_check
          %p217 = pneg %p92
        $region14: #{tpu_custom_call.1} parent=11 // pred_check_branch
          %219 = sbr.rel (%p217) target = $region16
        $region15: #{tpu_custom_call.1} parent=11 // pred_region
          _
        $region16: #{tpu_custom_call.1} parent=11 // pred_fallthru
          _
        // Predicated region
        $region17: #{tpu_custom_call.1} parent=11 // pred_check
          %p220 = pneg %p113
        $region18: #{tpu_custom_call.1} parent=11 // pred_check_branch
          %222 = sbr.rel (%p220) target = $region20
        $region19: #{tpu_custom_call.1} parent=11 // pred_region
          _
        $region20: #{tpu_custom_call.1} parent=11 // pred_fallthru
          _
        // Predicated region
        $region21: #{tpu_custom_call.1} parent=11 // pred_check
          %p223 = pneg %p134
        $region22: #{tpu_custom_call.1} parent=11 // pred_check_branch
          %225 = sbr.rel (%p223) target = $region24
        $region23: #{tpu_custom_call.1} parent=11 // pred_region
          _
        $region24: #{tpu_custom_call.1} parent=11 // pred_fallthru
          _
        // Predicated region
        $region25: #{tpu_custom_call.1} parent=11 // pred_check
          %p226 = pneg %p155
        $region26: #{tpu_custom_call.1} parent=11 // pred_check_branch
          %228 = sbr.rel (%p226) target = $region28
        $region27: #{tpu_custom_call.1} parent=11 // pred_region
          _
        $region28: #{tpu_custom_call.1} parent=11 // pred_fallthru
          _
        // Predicated region
        $region29: #{tpu_custom_call.1} parent=11 // pred_check
          %p229 = pneg %p176
        $region30: #{tpu_custom_call.1} parent=11 // pred_check_branch
          %231 = sbr.rel (%p229) target = $region32
        $region31: #{tpu_custom_call.1} parent=11 // pred_region
          _
        $region32: #{tpu_custom_call.1} parent=11 // pred_fallthru
          _
      $region12: #{tpu_custom_call.1} parent=5 // pred_fallthru
        _
      %p232 = scmp.lt.s32.totalorder %s19, 2
      // Predicated region
      $region33: #{tpu_custom_call.1} parent=5 // pred_check
        %p233 = pneg %p232
      $region34: #{tpu_custom_call.1} parent=5 // pred_check_branch
        %235 = sbr.rel (%p233) target = $region36
      $region35: #{tpu_custom_call.1} parent=5 // pred_region
        // Predicated region
        $region37: #{tpu_custom_call.1} parent=35 // pred_check
          %p236 = pneg %p39
        $region38: #{tpu_custom_call.1} parent=35 // pred_check_branch
          %238 = sbr.rel (%p236) target = $region40
        $region39: #{tpu_custom_call.1} parent=35 // pred_region
          %s239 = sand.u32 %s29, 1
          %s240 = scalar_lea.sflag [#allocation3], %s239
          %s241 = sand.u32 %s29, 1
          %s242 = smul.addr %s241, 16
          %s243 = scalar_lea.vmem [#allocation2], %s242
          %245 = vsyncadd %s240, 0
          %s246 = smul.addr %s19, 8
          %s247 = smul.addr %s246, 8
          %s248 = scalar_lea.hbm %s0, %s247
          %s249 = sshll.u32 %s248, 4
          %s250 = int_to_ptr.hbm [resolvable:$true] %s249
          %s251 = sshll.u32 %s243, 4
          %s252 = int_to_ptr.vmem [resolvable:$true] %s251
          %257 = dma.hbm_to_vmem [thread:$0]  %s250, 256, %s252, %s240, 128, 128, 8
        $region40: #{tpu_custom_call.1} parent=35 // pred_fallthru
          _
        // Predicated region
        $region41: #{tpu_custom_call.1} parent=35 // pred_check
          %p258 = pneg %p65
        $region42: #{tpu_custom_call.1} parent=35 // pred_check_branch
          %260 = sbr.rel (%p258) target = $region44
        $region43: #{tpu_custom_call.1} parent=35 // pred_region
          %p261 = scmp.lt.s32.totalorder %s19, 1
          %s262 = scalar_select %p261, %s19, 1
          %s263 = smul.addr %s262, 4
          %s264 = smul.addr %s263, 8
          %s265 = scalar_lea.vmem %s1, %s264
        $region44: #{tpu_custom_call.1} parent=35 // pred_fallthru
          _
      $region36: #{tpu_custom_call.1} parent=5 // pred_fallthru
        _
      %p266 = scmp.le.s32.totalorder 1, %s19
      %p267 = scmp.lt.s32.totalorder %s19, 3
      %p268 = pnand %p266, %p267
      %p269 = pneg %p268
      // Predicated region
      $region45: #{tpu_custom_call.1} parent=5 // pred_check
        _
      $region46: #{tpu_custom_call.1} parent=5 // pred_check_branch
        %271 = sbr.rel (%p268) target = $region48
      $region47: #{tpu_custom_call.1} parent=5 // pred_region
        %s272 = ssub.s32 %s19, 1
        %s273 = sand.u32 %s32, 1
        %s274 = scalar_lea.sflag [#allocation3], %s273
        %s275 = sand.u32 %s32, 1
        %s276 = smul.addr %s275, 16
        %s277 = scalar_lea.vmem [#allocation2], %s276
        // Predicated region
        $region49: #{tpu_custom_call.1} parent=47 // pred_check
          %p278 = pneg %p45
        $region50: #{tpu_custom_call.1} parent=47 // pred_check_branch
          %280 = sbr.rel (%p278) target = $region52
        $region51: #{tpu_custom_call.1} parent=47 // pred_region
          %282 = dma.done %s274, 256
        $region52: #{tpu_custom_call.1} parent=47 // pred_fallthru
          _
        %s283 = sand.u32 %s32, 1
        %s284 = scalar_lea.sflag [#allocation3], %s283
        %s285 = sand.u32 %s32, 1
        %s286 = smul.addr %s285, 16
        %s287 = scalar_lea.vmem [#allocation2], %s286
        %p288 = pneg %p45
        %p289 = pneg %p42
        %p290 = scmp.lt.s32.totalorder %s24, 1
        %s291 = scalar_select %p290, %s24, 1
        %s292 = smul.addr %s291, 4
        %s293 = smul.addr %s292, 8
        %s294 = scalar_lea.vmem %s1, %s293
        %p295 = pneg %p71
        %p296 = pneg %p68
        %p297 = pneg %p92
        %p298 = pneg %p89
        %p299 = pneg %p113
        %p300 = pneg %p110
        %p301 = pneg %p134
        %p302 = pneg %p131
        %p303 = pneg %p155
        %p304 = pneg %p152
        %p305 = pneg %p176
        %p306 = pneg %p173
        %p307 = pneg %p202
        %p308 = pneg %p199
        %s309 = sand.u32 %s189, 1
        %s310 = scalar_lea.sflag [#allocation4], %s309
        %s311 = sand.u32 %s189, 1
        %s312 = smul.addr %s311, 16
        %s313 = scalar_lea.vmem [#allocation5], %s312
        %p314 = scmp.lt.s32.totalorder %s24, 1
        %s315 = scalar_select %p314, %s24, 1
        %s316 = smul.addr %s315, 4
        %s317 = smul.addr %s316, 8
        %s318 = scalar_lea.vmem %s1, %s317
        %v319 = vld [vmem:[%s2] sm:$0xff]
        %v320 = vld [vmem:[%s2 + $0x8] sm:$0xff]
        %v321 = vld [vmem:[%s2 + $0x10] sm:$0xff]
        %v322 = vld [vmem:[%s2 + $0x18] sm:$0xff]
        %v323 = vsub.f32 1.0, %v319
        %v324 = vsub.f32 1.0, %v320
        %v325 = vsub.f32 1.0, %v321
        %v326 = vsub.f32 1.0, %v322
        %v327 = vld [vmem:[%s277] sm:$0xff]
        %v328 = vld [vmem:[%s277 + $0x8] sm:$0xff]
        %v329 = vld [vmem:[%s3] sm:$0xff]
        %v330 = vld [vmem:[%s3 + $0x8] sm:$0xff]
        %vm331 = vcmask 130048
        %v333 = vsel %vm331, %v327, 0
        %v336 = vsel %vm331, %v328, 0
        %338 = vmatpush.msra.mxu0 0.0
        %339 = vmatpush.msra.mxu0 0.0
        %340 = vmatpush.msra.mxu0 0.0
        %341 = vmatpush.msra.mxu0 0.0
        %342 = vmatpush.msra.mxu0 0.0
        %343 = vmatpush.msra.mxu0 0.0
        %344 = vmatpush.msra.mxu0 0.0
        %345 = vmatpush.msra.mxu0 0.0
        %346 = vmatpush.msra.mxu0 0.0
        %347 = vmatpush.msra.mxu0 0.0
        %348 = vmatpush.msra.mxu0 0.0
        %349 = vmatpush.msra.mxu0 0.0
        %350 = vmatpush.msra.mxu0 0.0
        %351 = vmatpush.msra.mxu0 0.0
        %352 = vmatpush.msra.mxu0 %v330
        %353 = vmatpush.msra.mxu0 %v329
        %354 = vmatmul.f32.gmra.mxu0 %v333
        %v355 = vpop.f32.mrf.mxu0
        %v356 = vadd.f32 0.0, %v355
        %357 = vmatmul.f32.gmra.mxu0 %v336
        %v358 = vpop.f32.mrf.mxu0
        %v359 = vadd.f32 0.0, %v358
        %360 = vdwg.mxu0
        %363 = vrot.lane.b32.xlu0 %v356, 112
        %v364 = vpop.permute.xlu0 %363
        %365 = vrot.lane.b32.xlu0 %v359, 112
        %v366 = vpop.permute.xlu0 %365
        %v369 = vld [vmem:[%s4] sm:$0xff]
        %v370 = vld [vmem:[%s4 + $0x8] sm:$0xff]
        %v371 = vld [vmem:[%s4 + $0x10] sm:$0xff]
        %v372 = vld [vmem:[%s4 + $0x18] sm:$0xff]
        %vm373 = vcmask 261120
        %v375 = vsel %vm373, %v369, 0
        %v378 = vsel %vm373, %v370, 0
        %v381 = vsel %vm373, %v371, 0
        %v384 = vsel %vm373, %v372, 0
        %386 = vmatpush.msra.mxu0 0.0
        %387 = vmatpush.msra.mxu0 0.0
        %388 = vmatpush.msra.mxu0 0.0
        %389 = vmatpush.msra.mxu0 0.0
        %390 = vmatpush.msra.mxu0 0.0
        %391 = vmatpush.msra.mxu0 0.0
        %392 = vmatpush.msra.mxu0 0.0
        %393 = vmatpush.msra.mxu0 0.0
        %394 = vmatpush.msra.mxu0 0.0
        %395 = vmatpush.msra.mxu0 0.0
        %396 = vmatpush.msra.mxu0 0.0
        %397 = vmatpush.msra.mxu0 0.0
        %398 = vmatpush.msra.mxu0 %v366
        %399 = vmatpush.msra.mxu0 %v364
        %400 = vmatpush.msra.mxu0 %v359
        %401 = vmatpush.msra.mxu0 %v356
        %402 = vmatmul.f32.gmra.mxu0 %v375
        %v403 = vpop.f32.mrf.mxu0
        %v404 = vadd.f32 0.0, %v403
        %405 = vmatmul.f32.gmra.mxu0 %v378
        %v406 = vpop.f32.mrf.mxu0
        %v407 = vadd.f32 0.0, %v406
        %408 = vmatmul.f32.gmra.mxu0 %v381
        %v409 = vpop.f32.mrf.mxu0
        %v410 = vadd.f32 0.0, %v409
        %411 = vmatmul.f32.gmra.mxu0 %v384
        %v412 = vpop.f32.mrf.mxu0
        %v413 = vadd.f32 0.0, %v412
        %414 = vdwg.mxu0
        %v415 = vld [vmem:[%s318] sm:$0xff]
        %v416 = vld [vmem:[%s318 + $0x8] sm:$0xff]
        %v417 = vld [vmem:[%s318 + $0x10] sm:$0xff]
        %v418 = vld [vmem:[%s318 + $0x18] sm:$0xff]
        %v419 = vmul.f32 %v319, %v415
        %v420 = vmul.f32 %v320, %v416
        %v421 = vmul.f32 %v321, %v417
        %v422 = vmul.f32 %v322, %v418
        %v423 = vmul.f32 %v323, %v404
        %v424 = vmul.f32 %v324, %v407
        %v425 = vmul.f32 %v325, %v410
        %v426 = vmul.f32 %v326, %v413
        %v427 = vadd.f32 %v419, %v423
        %v428 = vadd.f32 %v420, %v424
        %v429 = vadd.f32 %v421, %v425
        %v430 = vadd.f32 %v422, %v426
        %v431 = vld [vmem:[%s5] sm:$0xff]
        %v432 = vld [vmem:[%s5 + $0x8] sm:$0xff]
        %v433 = vld [vmem:[%s5 + $0x10] sm:$0xff]
        %v434 = vld [vmem:[%s5 + $0x18] sm:$0xff]
        %v436 = vsel %vm373, %v431, 0
        %v439 = vsel %vm373, %v432, 0
        %v442 = vsel %vm373, %v433, 0
        %v445 = vsel %vm373, %v434, 0
        %447 = vmatpush.msra.mxu0 0.0
        %448 = vmatpush.msra.mxu0 0.0
        %449 = vmatpush.msra.mxu0 0.0
        %450 = vmatpush.msra.mxu0 0.0
        %451 = vmatpush.msra.mxu0 0.0
        %452 = vmatpush.msra.mxu0 0.0
        %453 = vmatpush.msra.mxu0 0.0
        %454 = vmatpush.msra.mxu0 0.0
        %455 = vmatpush.msra.mxu0 0.0
        %456 = vmatpush.msra.mxu0 0.0
        %457 = vmatpush.msra.mxu0 0.0
        %458 = vmatpush.msra.mxu0 0.0
        %459 = vmatpush.msra.mxu0 %v430
        %460 = vmatpush.msra.mxu0 %v429
        %461 = vmatpush.msra.mxu0 %v428
        %462 = vmatpush.msra.mxu0 %v427
        %463 = vmatmul.f32.gmra.mxu0 %v436
        %v464 = vpop.f32.mrf.mxu0
        %v465 = vadd.f32 0.0, %v464
        %466 = vmatmul.f32.gmra.mxu0 %v439
        %v467 = vpop.f32.mrf.mxu0
        %v468 = vadd.f32 0.0, %v467
        %469 = vmatmul.f32.gmra.mxu0 %v442
        %v470 = vpop.f32.mrf.mxu0
        %v471 = vadd.f32 0.0, %v470
        %472 = vmatmul.f32.gmra.mxu0 %v445
        %v473 = vpop.f32.mrf.mxu0
        %v474 = vadd.f32 0.0, %v473
        %475 = vdwg.mxu0
        %478 = vrot.lane.b32.xlu0 %v471, 16
        %v479 = vpop.permute.xlu0 %478
        %480 = vrot.lane.b32.xlu0 %v474, 16
        %v481 = vpop.permute.xlu0 %480
        %v484 = vsel %vm331, %v465, %v479
        %v485 = vsel %vm331, %v468, %v481
        %v486 = vld [vmem:[%s6] sm:$0xff]
        %v487 = vld [vmem:[%s6 + $0x8] sm:$0xff]
        %v488 = vld [vmem:[%s6 + $0x10] sm:$0xff]
        %v489 = vld [vmem:[%s6 + $0x18] sm:$0xff]
        %v491 = vsel %vm373, %v484, 0
        %v494 = vsel %vm373, %v485, 0
        %496 = vmatpush.msra.mxu0 0.0
        %497 = vmatpush.msra.mxu0 0.0
        %498 = vmatpush.msra.mxu0 0.0
        %499 = vmatpush.msra.mxu0 0.0
        %500 = vmatpush.msra.mxu0 0.0
        %501 = vmatpush.msra.mxu0 0.0
        %502 = vmatpush.msra.mxu0 0.0
        %503 = vmatpush.msra.mxu0 0.0
        %504 = vmatpush.msra.mxu0 0.0
        %505 = vmatpush.msra.mxu0 0.0
        %506 = vmatpush.msra.mxu0 0.0
        %507 = vmatpush.msra.mxu0 0.0
        %508 = vmatpush.msra.mxu0 %v489
        %509 = vmatpush.msra.mxu0 %v488
        %510 = vmatpush.msra.mxu0 %v487
        %511 = vmatpush.msra.mxu0 %v486
        %512 = vmatmul.f32.gmra.mxu0 %v491
        %v513 = vpop.f32.mrf.mxu0
        %v514 = vadd.f32 0.0, %v513
        %515 = vmatmul.f32.gmra.mxu0 %v494
        %v516 = vpop.f32.mrf.mxu0
        %v517 = vadd.f32 0.0, %v516
        %518 = vdwg.mxu0
        %v519 = vmul.f32 %v514, %v514
        %v520 = vmul.f32 %v517, %v517
        %523 = vrot.lane.b32.xlu0 %v519, 112
        %v524 = vpop.permute.xlu0 %523
        %525 = vrot.lane.b32.xlu0 %v520, 112
        %v526 = vpop.permute.xlu0 %525
        %v529 = vadd.f32 %v519, %v524
        %v530 = vadd.f32 %v520, %v526
        %v531 = vrsqrt.pop %v529
        %v532 = vmul.f32 %v531, %v529
        %v533 = vmul.f32 %v532, %v531
        %v534 = vmul.f32 0.5, %v533
        %v535 = vsub.f32 1.5, %v534
        %v536 = vmul.f32 %v531, %v535
        %v537 = vmul.f32 %v529, %v536
        %vm538 = vcmp.eq.f32.partialorder %v529, inf
        %v539 = vsel %vm538, %v529, %v537
        %vm540 = vcmp.eq.f32.partialorder %v529, 0.0
        %v541 = vand.u32 %v529, 2147483648
        %v542 = vsel %vm540, %v541, %v539
        %v543 = vrsqrt.pop %v530
        %v544 = vmul.f32 %v543, %v530
        %v545 = vmul.f32 %v544, %v543
        %v546 = vmul.f32 0.5, %v545
        %v547 = vsub.f32 1.5, %v546
        %v548 = vmul.f32 %v543, %v547
        %v549 = vmul.f32 %v530, %v548
        %vm550 = vcmp.eq.f32.partialorder %v530, inf
        %v551 = vsel %vm550, %v530, %v549
        %vm552 = vcmp.eq.f32.partialorder %v530, 0.0
        %v553 = vand.u32 %v530, 2147483648
        %v554 = vsel %vm552, %v553, %v551
        %555 = vst.msk [vmem:[%s313] sm:$0xff] %vm331, %v542
        %556 = vst.msk [vmem:[%s313 + $0x8] sm:$0xff] %vm331, %v554
        %s557 = sand.u32 %s189, 1
        %s558 = scalar_lea.sflag [#allocation4], %s557
        %s559 = sand.u32 %s189, 1
        %s560 = smul.addr %s559, 16
        %s561 = scalar_lea.vmem [#allocation5], %s560
        // Predicated region
        $region53: #{tpu_custom_call.1} parent=47 // pred_check
          %p562 = pneg %p199
        $region54: #{tpu_custom_call.1} parent=47 // pred_check_branch
          %564 = sbr.rel (%p562) target = $region56
        $region55: #{tpu_custom_call.1} parent=47 // pred_region
          %566 = vsyncadd %s558, 0
          %s567 = smul.addr %s24, 2
          %s568 = smul.addr %s567, 8
          %s569 = scalar_lea.hbm %s7, %s568
          %s570 = sshll.u32 %s561, 4
          %s571 = int_to_ptr.vmem [resolvable:$true] %s570
          %s572 = sshll.u32 %s569, 4
          %s573 = int_to_ptr.hbm [resolvable:$true] %s572
          %578 = dma.vmem_to_hbm [thread:$0]  %s571, 256, %s573, %s558, 128, 128, 8
        $region56: #{tpu_custom_call.1} parent=47 // pred_fallthru
          _
      $region48: #{tpu_custom_call.1} parent=5 // pred_fallthru
        _
      %p579 = scmp.le.s32.totalorder 2, %s19
      // Predicated region
      $region57: #{tpu_custom_call.1} parent=5 // pred_check
        %p580 = pneg %p579
      $region58: #{tpu_custom_call.1} parent=5 // pred_check_branch
        %582 = sbr.rel (%p580) target = $region60
      $region59: #{tpu_custom_call.1} parent=5 // pred_region
        %s583 = ssub.s32 %s19, 2
        // Predicated region
        $region61: #{tpu_custom_call.1} parent=59 // pred_check
          %p584 = pneg %p205
        $region62: #{tpu_custom_call.1} parent=59 // pred_check_branch
          %586 = sbr.rel (%p584) target = $region64
        $region63: #{tpu_custom_call.1} parent=59 // pred_region
          %s587 = sand.u32 %s190, 1
          %s588 = scalar_lea.sflag [#allocation4], %s587
          %s589 = sand.u32 %s190, 1
          %s590 = smul.addr %s589, 16
          %s591 = scalar_lea.vmem [#allocation5], %s590
          %593 = dma.done %s588, 256
        $region64: #{tpu_custom_call.1} parent=59 // pred_fallthru
          _
      $region60: #{tpu_custom_call.1} parent=5 // pred_fallthru
        _
    $region6: #{tpu_custom_call.1} parent=1 // loop_footer
      %s23 = sadd.s32 1, %s19
    $region7: #{tpu_custom_call.1} parent=1 // loop_footer_branch
      %18 = sbr.rel target = $region3
    $region8: #{tpu_custom_call.1} parent=1 // loop_exit
      _
    %594 = vsyncpa [#allocation3], 1
    %s595 = scalar_lea.sflag [#allocation3], 1
    %596 = vsyncpa %s595, 1
    %597 = vsyncpa [#allocation4], 1
    %s598 = scalar_lea.sflag [#allocation4], 1
    %599 = vsyncpa %s598, 1

</llo_original>
